<compile_context>
chip_gen: v7x
topology: tpu7x:2x2x1
jax: 0.10.0
libtpu: 0.0.40
codegen_flags: <defaults>
</compile_context>

<pallas_src>
import jax
import jax.numpy as jnp
from jax.experimental import pallas as pl
from jax.experimental.pallas import tpu as pltpu

INPUT_DIM = 4 * 16 * 16   # from example input [2, 4, 16, 16]
H1 = 117
H2 = 148
OUTPUT_DIM = 10

LANE = 128


def _round_up(n, m=LANE):
    return ((n + m - 1) // m) * m


def _pad_to(a, shape):
    pads = [(0, s - d) for d, s in zip(a.shape, shape)]
    return jnp.pad(a, pads)


def mlp_kernel(x_ref, w1_ref, b1_ref, w2_ref, b2_ref, w3_ref, b3_ref, o_ref):
    x = x_ref[...]                                                    # [B, Dp] bf16
    # layer 1: Linear -> (dropout=identity) -> ReLU
    h1 = jnp.dot(x, w1_ref[...], preferred_element_type=jnp.float32) + b1_ref[...]
    h1 = jnp.maximum(h1, 0.0).astype(jnp.bfloat16)
    # layer 2: Linear -> (dropout=identity) -> ReLU
    h2 = jnp.dot(h1, w2_ref[...], preferred_element_type=jnp.float32) + b2_ref[...]
    h2 = jnp.maximum(h2, 0.0).astype(jnp.bfloat16)
    # output layer: Linear (no activation)
    o_ref[...] = (jnp.dot(h2, w3_ref[...], preferred_element_type=jnp.float32)
                  + b3_ref[...]).astype(o_ref.dtype)


def mlp_forward(x, w1, b1, w2, b2, w3, b3):
    B = x.shape[0]
    xf = x.reshape(B, -1)                 # x.view(batch_size, -1)
    D = xf.shape[1]
    out_dim = w3.shape[1]

    # lane-dense (multiple-of-128) padded sizes
    D_P = _round_up(D)
    H1_P = _round_up(w1.shape[1])
    H2_P = _round_up(w2.shape[1])
    OUT_P = _round_up(out_dim)

    # pad + cast: activations/weights bf16, biases f32 (lane-dense rows)
    xf_p = _pad_to(xf, (B, D_P)).astype(jnp.bfloat16)
    w1_p = _pad_to(w1, (D_P, H1_P)).astype(jnp.bfloat16)
    b1_p = _pad_to(b1, (1, H1_P)).astype(jnp.float32)
    w2_p = _pad_to(w2, (H1_P, H2_P)).astype(jnp.bfloat16)
    b2_p = _pad_to(b2, (1, H2_P)).astype(jnp.float32)
    w3_p = _pad_to(w3, (H2_P, OUT_P)).astype(jnp.bfloat16)
    b3_p = _pad_to(b3, (1, OUT_P)).astype(jnp.float32)

    def whole(shape):
        # full-array block (no grid), resident in VMEM
        return pl.BlockSpec(shape, lambda: tuple(0 for _ in shape))

    flops = 2 * B * (D_P * H1_P + H1_P * H2_P + H2_P * OUT_P)
    bytes_accessed = (
        xf_p.size * 2 + w1_p.size * 2 + w2_p.size * 2 + w3_p.size * 2
        + b1_p.size * 4 + b2_p.size * 4 + b3_p.size * 4
        + B * OUT_P * 4
    )

    out_p = pl.pallas_call(
        mlp_kernel,
        out_shape=jax.ShapeDtypeStruct((B, OUT_P), jnp.float32),
        in_specs=[
            whole((B, D_P)),
            whole(w1_p.shape), whole(b1_p.shape),
            whole(w2_p.shape), whole(b2_p.shape),
            whole(w3_p.shape), whole(b3_p.shape),
        ],
        out_specs=whole((B, OUT_P)),
        cost_estimate=pl.CostEstimate(
            flops=flops, transcendentals=0, bytes_accessed=bytes_accessed),
    )(xf_p, w1_p, b1_p, w2_p, b2_p, w3_p, b3_p)

    # slice padded columns back off
    return out_p[:, :out_dim]


def init_params(key, input_dim, output_dim):
    # Deterministic init mimicking nn.Linear's U(-1/sqrt(fan_in), 1/sqrt(fan_in)).
    # Weights stored as [in, out] (transposed vs. PyTorch's [out, in]).
    ks = jax.random.split(key, 6)

    def lin(kw, kb, fan_in, fan_out):
        bound = 1.0 / jnp.sqrt(fan_in)
        w = jax.random.uniform(kw, (fan_in, fan_out), jnp.float32, -bound, bound)
        b = jax.random.uniform(kb, (1, fan_out), jnp.float32, -bound, bound)
        return w, b

    w1, b1 = lin(ks[0], ks[1], input_dim, H1)
    w2, b2 = lin(ks[2], ks[3], H1, H2)
    w3, b3 = lin(ks[4], ks[5], H2, output_dim)
    return w1, b1, w2, b2, w3, b3


def _bf16_ref(x, w1, b1, w2, b2, w3, b3):
    # plain-JAX reference mirroring the kernel's bf16-input / f32-accumulate math
    def r(a):
        return a.astype(jnp.bfloat16).astype(jnp.float32)
    xf = r(x.reshape(x.shape[0], -1))
    h1 = r(jnp.maximum(xf @ r(w1) + b1, 0.0))
    h2 = r(jnp.maximum(h1 @ r(w2) + b2, 0.0))
    return h2 @ r(w3) + b3


if __name__ == "__main__":
    key = jax.random.PRNGKey(0)
    kx, kp = jax.random.split(key)

    x = jax.random.normal(kx, (2, 4, 16, 16), dtype=jnp.float32)   # NCHW
    params = init_params(kp, INPUT_DIM, OUTPUT_DIM)

    y = mlp_forward(x, *params)
    jax.block_until_ready(y)

    y_ref = _bf16_ref(x, *params)
    assert y.shape == (2, OUTPUT_DIM)
    assert jnp.allclose(y, y_ref, atol=2e-2, rtol=2e-2)

    print("KERNEL_OK")
</pallas_src>

<mosaic_0001>
module attributes {stable_mosaic.version = 11 : i64} {
  func.func @mlp_kernel(%arg0: memref<2x1024xbf16, #tpu.memory_space<vmem>>, %arg1: memref<1024x128xbf16, #tpu.memory_space<vmem>>, %arg2: memref<1x128xf32, #tpu.memory_space<vmem>>, %arg3: memref<128x256xbf16, #tpu.memory_space<vmem>>, %arg4: memref<1x256xf32, #tpu.memory_space<vmem>>, %arg5: memref<256x128xbf16, #tpu.memory_space<vmem>>, %arg6: memref<1x128xf32, #tpu.memory_space<vmem>>, %arg7: memref<2x128xf32, #tpu.memory_space<vmem>>) attributes {dimension_semantics = [], scalar_prefetch = 0 : i64, scratch_operands = 0 : i64, tpu.core_type = #tpu.core_type<tc>} {
    %c0 = arith.constant 0 : index
    %c0_0 = arith.constant 0 : index
    %0 = vector.load %arg0[%c0, %c0_0] : memref<2x1024xbf16, #tpu.memory_space<vmem>>, vector<2x1024xbf16>
    %c0_1 = arith.constant 0 : index
    %c0_2 = arith.constant 0 : index
    %1 = vector.load %arg1[%c0_1, %c0_2] : memref<1024x128xbf16, #tpu.memory_space<vmem>>, vector<1024x128xbf16>
    %cst = arith.constant dense<0.000000e+00> : vector<2x128xf32>
    %2 = tpu.matmul %0, %1, %cst {dimension_numbers = #tpu.dot_dimension_numbers<[1], [0], [0], [1], [0, 0, 1, 1], [], []>} : vector<2x1024xbf16>, vector<1024x128xbf16>, vector<2x128xf32> -> vector<2x128xf32>
    %c0_3 = arith.constant 0 : index
    %c0_4 = arith.constant 0 : index
    %3 = vector.load %arg2[%c0_3, %c0_4] : memref<1x128xf32, #tpu.memory_space<vmem>>, vector<1x128xf32>
    %4 = vector.broadcast %3 : vector<1x128xf32> to vector<2x128xf32>
    %5 = arith.addf %2, %4 : vector<2x128xf32>
    %cst_5 = arith.constant 0.000000e+00 : f32
    %6 = vector.broadcast %cst_5 : f32 to vector<2x128xf32>
    %7 = arith.maximumf %5, %6 : vector<2x128xf32>
    %8 = arith.truncf %7 : vector<2x128xf32> to vector<2x128xbf16>
    %c0_6 = arith.constant 0 : index
    %c0_7 = arith.constant 0 : index
    %9 = vector.load %arg3[%c0_6, %c0_7] : memref<128x256xbf16, #tpu.memory_space<vmem>>, vector<128x256xbf16>
    %cst_8 = arith.constant dense<0.000000e+00> : vector<2x256xf32>
    %10 = tpu.matmul %8, %9, %cst_8 {dimension_numbers = #tpu.dot_dimension_numbers<[1], [0], [0], [1], [0, 0, 1, 1], [], []>} : vector<2x128xbf16>, vector<128x256xbf16>, vector<2x256xf32> -> vector<2x256xf32>
    %c0_9 = arith.constant 0 : index
    %c0_10 = arith.constant 0 : index
    %11 = vector.load %arg4[%c0_9, %c0_10] : memref<1x256xf32, #tpu.memory_space<vmem>>, vector<1x256xf32>
    %12 = vector.broadcast %11 : vector<1x256xf32> to vector<2x256xf32>
    %13 = arith.addf %10, %12 : vector<2x256xf32>
    %cst_11 = arith.constant 0.000000e+00 : f32
    %14 = vector.broadcast %cst_11 : f32 to vector<2x256xf32>
    %15 = arith.maximumf %13, %14 : vector<2x256xf32>
    %16 = arith.truncf %15 : vector<2x256xf32> to vector<2x256xbf16>
    %c0_12 = arith.constant 0 : index
    %c0_13 = arith.constant 0 : index
    %17 = vector.load %arg5[%c0_12, %c0_13] : memref<256x128xbf16, #tpu.memory_space<vmem>>, vector<256x128xbf16>
    %cst_14 = arith.constant dense<0.000000e+00> : vector<2x128xf32>
    %18 = tpu.matmul %16, %17, %cst_14 {dimension_numbers = #tpu.dot_dimension_numbers<[1], [0], [0], [1], [0, 0, 1, 1], [], []>} : vector<2x256xbf16>, vector<256x128xbf16>, vector<2x128xf32> -> vector<2x128xf32>
    %c0_15 = arith.constant 0 : index
    %c0_16 = arith.constant 0 : index
    %19 = vector.load %arg6[%c0_15, %c0_16] : memref<1x128xf32, #tpu.memory_space<vmem>>, vector<1x128xf32>
    %20 = vector.broadcast %19 : vector<1x128xf32> to vector<2x128xf32>
    %21 = arith.addf %18, %20 : vector<2x128xf32>
    %c0_17 = arith.constant 0 : index
    %c0_18 = arith.constant 0 : index
    %22 = vector.load %arg7[%c0_17, %c0_18] : memref<2x128xf32, #tpu.memory_space<vmem>>, vector<2x128xf32>
    tpu.vector_store %arg7[%c0_17, %c0_18], %21 {strides = array<i32>} : memref<2x128xf32, #tpu.memory_space<vmem>>, vector<2x128xf32>,
    return
  }
}

</mosaic_0001>

<llo_original>
// kernel: tpu_custom_call.1
$region0: #{tpu_custom_call.1}
  #allocation0 [shape = 'u32[]', space=smem, size = 0x4, offset = 0x4, fixed_abs, tag = 'smem constant byte address 0x4 - core index']
  #allocation1 [shape = 'u32[144,128]{1,0:T(1,128)}', space=vmem, size = 0x12000, scoped, tag = 'internal scratch']
  %s0 = inlined_call_operand.hbm [shape: bf16[2,1024], index: 0, kind: input, shape index: {}]
  %s1 = inlined_call_operand.hbm [shape: bf16[1024,128], index: 1, kind: input, shape index: {}]
  %s2 = inlined_call_operand.vmem [shape: f32[1,128], index: 2, kind: input, shape index: {}]
  %s3 = inlined_call_operand.hbm [shape: bf16[128,256], index: 3, kind: input, shape index: {}]
  %s4 = inlined_call_operand.vmem [shape: f32[1,256], index: 4, kind: input, shape index: {}]
  %s5 = inlined_call_operand.hbm [shape: bf16[256,128], index: 5, kind: input, shape index: {}]
  %s6 = inlined_call_operand.vmem [shape: f32[1,128], index: 6, kind: input, shape index: {}]
  %s7 = inlined_call_operand.hbm [shape: f32[2,128], index: 7, kind: output, shape index: {}]
  %s8 = sld [smem:[#allocation0]]
  $region54: #{tpu_custom_call.1} parent=0
    _
  %s10 = ssub.s32 1, %s8
  %s11 = scalar_select 0, %s10, %s8
  $region1: #{tpu_custom_call.1} parent=0
    #allocation2 [shape = 'u8[4096]{0}', space=vmem, size = 0x1000, scoped, tag = 'input window, operand 0, single buffered']
    #allocation3 [shape = 's32[1]{0}', space=sflag, size = 0x4, scoped, tag = 'scoped memory for tpu_custom_call.1']
    #allocation4 [shape = 's32[1]{0}', space=sflag, size = 0x4, scoped, tag = 'scoped memory for tpu_custom_call.1']
    #allocation5 [shape = 'u8[262144]{0}', space=vmem, size = 0x40000, scoped, tag = 'input window, operand 1, single buffered']
    #allocation6 [shape = 's32[1]{0}', space=sflag, size = 0x4, scoped, tag = 'scoped memory for tpu_custom_call.1']
    #allocation7 [shape = 'u8[65536]{0}', space=vmem, size = 0x10000, scoped, tag = 'input window, operand 3, single buffered']
    #allocation8 [shape = 'u8[65536]{0}', space=vmem, size = 0x10000, scoped, tag = 'input window, operand 5, single buffered']
    #allocation9 [shape = 's32[1]{0}', space=sflag, size = 0x4, scoped, tag = 'scoped memory for tpu_custom_call.1']
    #allocation10 [shape = 'u8[1024]{0}', space=vmem, size = 0x400, scoped, tag = 'output window, operand 0, single buffered']
    %12 = vsyncpa [#allocation3], 0
    %13 = vsyncpa [#allocation6], 0
    %14 = vsyncpa [#allocation9], 0
    %15 = vsyncpa [#allocation4], 0
    // Predicated region
    $region2: #{tpu_custom_call.1} parent=1 // pred_check
      _
    $region3: #{tpu_custom_call.1} parent=1 // pred_check_branch
      %17 = sbr.rel (0) target = $region5
    $region4: #{tpu_custom_call.1} parent=1 // pred_region
      %s19 = ssub.s32 128, 128
      %20 = vsyncadd [#allocation3], %s19
      %s22 = sshll.u32 [#allocation2], 4
      %s23 = int_to_ptr.vmem [resolvable:$true] %s22
      %25 = dma.hbm_to_vmem [thread:$0]  %s0, 128, %s23, [#allocation3]
    $region5: #{tpu_custom_call.1} parent=1 // pred_fallthru
      _
    // Predicated region
    $region6: #{tpu_custom_call.1} parent=1 // pred_check
      _
    $region7: #{tpu_custom_call.1} parent=1 // pred_check_branch
      %27 = sbr.rel (0) target = $region9
    $region8: #{tpu_custom_call.1} parent=1 // pred_region
      %s29 = ssub.s32 8192, 8192
      %30 = vsyncadd [#allocation6], %s29
      %s31 = sshll.u32 [#allocation5], 4
      %s32 = int_to_ptr.vmem [resolvable:$true] %s31
      %37 = dma.hbm_to_vmem [thread:$0]  %s1, 8192, %s32, [#allocation6], 64, 64, 4
    $region9: #{tpu_custom_call.1} parent=1 // pred_fallthru
      _
    // Predicated region
    $region10: #{tpu_custom_call.1} parent=1 // pred_check
      _
    $region11: #{tpu_custom_call.1} parent=1 // pred_check_branch
      %39 = sbr.rel (0) target = $region13
    $region12: #{tpu_custom_call.1} parent=1 // pred_region
      _
    $region13: #{tpu_custom_call.1} parent=1 // pred_fallthru
      _
    // Predicated region
    $region14: #{tpu_custom_call.1} parent=1 // pred_check
      _
    $region15: #{tpu_custom_call.1} parent=1 // pred_check_branch
      %41 = sbr.rel (0) target = $region17
    $region16: #{tpu_custom_call.1} parent=1 // pred_region
      %s43 = ssub.s32 2048, 2048
      %44 = vsyncadd [#allocation6], %s43
      %s45 = sshll.u32 [#allocation7], 4
      %s46 = int_to_ptr.vmem [resolvable:$true] %s45
      %51 = dma.hbm_to_vmem [thread:$0]  %s3, 2048, %s46, [#allocation6], 128, 128, 8
    $region17: #{tpu_custom_call.1} parent=1 // pred_fallthru
      _
    // Predicated region
    $region18: #{tpu_custom_call.1} parent=1 // pred_check
      _
    $region19: #{tpu_custom_call.1} parent=1 // pred_check_branch
      %53 = sbr.rel (0) target = $region21
    $region20: #{tpu_custom_call.1} parent=1 // pred_region
      _
    $region21: #{tpu_custom_call.1} parent=1 // pred_fallthru
      _
    // Predicated region
    $region22: #{tpu_custom_call.1} parent=1 // pred_check
      _
    $region23: #{tpu_custom_call.1} parent=1 // pred_check_branch
      %55 = sbr.rel (0) target = $region25
    $region24: #{tpu_custom_call.1} parent=1 // pred_region
      %s57 = ssub.s32 2048, 2048
      %58 = vsyncadd [#allocation9], %s57
      %s59 = sshll.u32 [#allocation8], 4
      %s60 = int_to_ptr.vmem [resolvable:$true] %s59
      %65 = dma.hbm_to_vmem [thread:$0]  %s5, 2048, %s60, [#allocation9], 64, 64, 4
    $region25: #{tpu_custom_call.1} parent=1 // pred_fallthru
      _
    // Predicated region
    $region26: #{tpu_custom_call.1} parent=1 // pred_check
      _
    $region27: #{tpu_custom_call.1} parent=1 // pred_check_branch
      %67 = sbr.rel (0) target = $region29
    $region28: #{tpu_custom_call.1} parent=1 // pred_region
      _
    $region29: #{tpu_custom_call.1} parent=1 // pred_fallthru
      _
    // Predicated region
    $region30: #{tpu_custom_call.1} parent=1 // pred_check
      _
    $region31: #{tpu_custom_call.1} parent=1 // pred_check_branch
      %69 = sbr.rel (0) target = $region33
    $region32: #{tpu_custom_call.1} parent=1 // pred_region
      %70 = dma.done [#allocation3], 128
    $region33: #{tpu_custom_call.1} parent=1 // pred_fallthru
      _
    // Predicated region
    $region34: #{tpu_custom_call.1} parent=1 // pred_check
      _
    $region35: #{tpu_custom_call.1} parent=1 // pred_check_branch
      %72 = sbr.rel (0) target = $region37
    $region36: #{tpu_custom_call.1} parent=1 // pred_region
      %73 = dma.done [#allocation6], 8192
    $region37: #{tpu_custom_call.1} parent=1 // pred_fallthru
      _
    // Predicated region
    $region38: #{tpu_custom_call.1} parent=1 // pred_check
      _
    $region39: #{tpu_custom_call.1} parent=1 // pred_check_branch
      %75 = sbr.rel (0) target = $region41
    $region40: #{tpu_custom_call.1} parent=1 // pred_region
      %76 = dma.done [#allocation6], 2048
    $region41: #{tpu_custom_call.1} parent=1 // pred_fallthru
      _
    // Predicated region
    $region42: #{tpu_custom_call.1} parent=1 // pred_check
      _
    $region43: #{tpu_custom_call.1} parent=1 // pred_check_branch
      %78 = sbr.rel (0) target = $region45
    $region44: #{tpu_custom_call.1} parent=1 // pred_region
      %79 = dma.done [#allocation9], 2048
    $region45: #{tpu_custom_call.1} parent=1 // pred_fallthru
      _
    %v81 = vld [vmem:[#allocation2] sm:$0xff]
    %v82 = vld [vmem:[#allocation5] sm:$0xf]
    %v83 = vld [vmem:[#allocation5 + $0x4] sm:$0xf]
    %v84 = vld [vmem:[#allocation5 + $0x8] sm:$0xf]
    %v85 = vld [vmem:[#allocation5 + $0xc] sm:$0xf]
    %v86 = vld [vmem:[#allocation5 + $0x10] sm:$0xf]
    %v87 = vld [vmem:[#allocation5 + $0x14] sm:$0xf]
    %v88 = vld [vmem:[#allocation5 + $0x18] sm:$0xf]
    %v89 = vld [vmem:[#allocation5 + $0x1c] sm:$0xf]
    %v90 = vld [vmem:[#allocation5 + $0x20] sm:$0xf]
    %v91 = vld [vmem:[#allocation5 + $0x24] sm:$0xf]
    %v92 = vld [vmem:[#allocation5 + $0x28] sm:$0xf]
    %v93 = vld [vmem:[#allocation5 + $0x2c] sm:$0xf]
    %v94 = vld [vmem:[#allocation5 + $0x30] sm:$0xf]
    %v95 = vld [vmem:[#allocation5 + $0x34] sm:$0xf]
    %v96 = vld [vmem:[#allocation5 + $0x38] sm:$0xf]
    %v97 = vld [vmem:[#allocation5 + $0x3c] sm:$0xf]
    %v98 = vld [vmem:[#allocation5 + $0x40] sm:$0xf]
    %v99 = vld [vmem:[#allocation5 + $0x44] sm:$0xf]
    %v100 = vld [vmem:[#allocation5 + $0x48] sm:$0xf]
    %v101 = vld [vmem:[#allocation5 + $0x4c] sm:$0xf]
    %v102 = vld [vmem:[#allocation5 + $0x50] sm:$0xf]
    %v103 = vld [vmem:[#allocation5 + $0x54] sm:$0xf]
    %v104 = vld [vmem:[#allocation5 + $0x58] sm:$0xf]
    %v105 = vld [vmem:[#allocation5 + $0x5c] sm:$0xf]
    %v106 = vld [vmem:[#allocation5 + $0x60] sm:$0xf]
    %v107 = vld [vmem:[#allocation5 + $0x64] sm:$0xf]
    %v108 = vld [vmem:[#allocation5 + $0x68] sm:$0xf]
    %v109 = vld [vmem:[#allocation5 + $0x6c] sm:$0xf]
    %v110 = vld [vmem:[#allocation5 + $0x70] sm:$0xf]
    %v111 = vld [vmem:[#allocation5 + $0x74] sm:$0xf]
    %v112 = vld [vmem:[#allocation5 + $0x78] sm:$0xf]
    %v113 = vld [vmem:[#allocation5 + $0x7c] sm:$0xf]
    %v114 = vld [vmem:[#allocation5 + $0x80] sm:$0xf]
    %v115 = vld [vmem:[#allocation5 + $0x84] sm:$0xf]
    %v116 = vld [vmem:[#allocation5 + $0x88] sm:$0xf]
    %v117 = vld [vmem:[#allocation5 + $0x8c] sm:$0xf]
    %v118 = vld [vmem:[#allocation5 + $0x90] sm:$0xf]
    %v119 = vld [vmem:[#allocation5 + $0x94] sm:$0xf]
    %v120 = vld [vmem:[#allocation5 + $0x98] sm:$0xf]
    %v121 = vld [vmem:[#allocation5 + $0x9c] sm:$0xf]
    %v122 = vld [vmem:[#allocation5 + $0xa0] sm:$0xf]
    %v123 = vld [vmem:[#allocation5 + $0xa4] sm:$0xf]
    %v124 = vld [vmem:[#allocation5 + $0xa8] sm:$0xf]
    %v125 = vld [vmem:[#allocation5 + $0xac] sm:$0xf]
    %v126 = vld [vmem:[#allocation5 + $0xb0] sm:$0xf]
    %v127 = vld [vmem:[#allocation5 + $0xb4] sm:$0xf]
    %v128 = vld [vmem:[#allocation5 + $0xb8] sm:$0xf]
    %v129 = vld [vmem:[#allocation5 + $0xbc] sm:$0xf]
    %v130 = vld [vmem:[#allocation5 + $0xc0] sm:$0xf]
    %v131 = vld [vmem:[#allocation5 + $0xc4] sm:$0xf]
    %v132 = vld [vmem:[#allocation5 + $0xc8] sm:$0xf]
    %v133 = vld [vmem:[#allocation5 + $0xcc] sm:$0xf]
    %v134 = vld [vmem:[#allocation5 + $0xd0] sm:$0xf]
    %v135 = vld [vmem:[#allocation5 + $0xd4] sm:$0xf]
    %v136 = vld [vmem:[#allocation5 + $0xd8] sm:$0xf]
    %v137 = vld [vmem:[#allocation5 + $0xdc] sm:$0xf]
    %v138 = vld [vmem:[#allocation5 + $0xe0] sm:$0xf]
    %v139 = vld [vmem:[#allocation5 + $0xe4] sm:$0xf]
    %v140 = vld [vmem:[#allocation5 + $0xe8] sm:$0xf]
    %v141 = vld [vmem:[#allocation5 + $0xec] sm:$0xf]
    %v142 = vld [vmem:[#allocation5 + $0xf0] sm:$0xf]
    %v143 = vld [vmem:[#allocation5 + $0xf4] sm:$0xf]
    %v144 = vld [vmem:[#allocation5 + $0xf8] sm:$0xf]
    %v145 = vld [vmem:[#allocation5 + $0xfc] sm:$0xf]
    %v146 = vld [vmem:[#allocation5 + $0x100] sm:$0xf]
    %v147 = vld [vmem:[#allocation5 + $0x104] sm:$0xf]
    %v148 = vld [vmem:[#allocation5 + $0x108] sm:$0xf]
    %v149 = vld [vmem:[#allocation5 + $0x10c] sm:$0xf]
    %v150 = vld [vmem:[#allocation5 + $0x110] sm:$0xf]
    %v151 = vld [vmem:[#allocation5 + $0x114] sm:$0xf]
    %v152 = vld [vmem:[#allocation5 + $0x118] sm:$0xf]
    %v153 = vld [vmem:[#allocation5 + $0x11c] sm:$0xf]
    %v154 = vld [vmem:[#allocation5 + $0x120] sm:$0xf]
    %v155 = vld [vmem:[#allocation5 + $0x124] sm:$0xf]
    %v156 = vld [vmem:[#allocation5 + $0x128] sm:$0xf]
    %v157 = vld [vmem:[#allocation5 + $0x12c] sm:$0xf]
    %v158 = vld [vmem:[#allocation5 + $0x130] sm:$0xf]
    %v159 = vld [vmem:[#allocation5 + $0x134] sm:$0xf]
    %v160 = vld [vmem:[#allocation5 + $0x138] sm:$0xf]
    %v161 = vld [vmem:[#allocation5 + $0x13c] sm:$0xf]
    %v162 = vld [vmem:[#allocation5 + $0x140] sm:$0xf]
    %v163 = vld [vmem:[#allocation5 + $0x144] sm:$0xf]
    %v164 = vld [vmem:[#allocation5 + $0x148] sm:$0xf]
    %v165 = vld [vmem:[#allocation5 + $0x14c] sm:$0xf]
    %v166 = vld [vmem:[#allocation5 + $0x150] sm:$0xf]
    %v167 = vld [vmem:[#allocation5 + $0x154] sm:$0xf]
    %v168 = vld [vmem:[#allocation5 + $0x158] sm:$0xf]
    %v169 = vld [vmem:[#allocation5 + $0x15c] sm:$0xf]
    %v170 = vld [vmem:[#allocation5 + $0x160] sm:$0xf]
    %v171 = vld [vmem:[#allocation5 + $0x164] sm:$0xf]
    %v172 = vld [vmem:[#allocation5 + $0x168] sm:$0xf]
    %v173 = vld [vmem:[#allocation5 + $0x16c] sm:$0xf]
    %v174 = vld [vmem:[#allocation5 + $0x170] sm:$0xf]
    %v175 = vld [vmem:[#allocation5 + $0x174] sm:$0xf]
    %v176 = vld [vmem:[#allocation5 + $0x178] sm:$0xf]
    %v177 = vld [vmem:[#allocation5 + $0x17c] sm:$0xf]
    %v178 = vld [vmem:[#allocation5 + $0x180] sm:$0xf]
    %v179 = vld [vmem:[#allocation5 + $0x184] sm:$0xf]
    %v180 = vld [vmem:[#allocation5 + $0x188] sm:$0xf]
    %v181 = vld [vmem:[#allocation5 + $0x18c] sm:$0xf]
    %v182 = vld [vmem:[#allocation5 + $0x190] sm:$0xf]
    %v183 = vld [vmem:[#allocation5 + $0x194] sm:$0xf]
    %v184 = vld [vmem:[#allocation5 + $0x198] sm:$0xf]
    %v185 = vld [vmem:[#allocation5 + $0x19c] sm:$0xf]
    %v186 = vld [vmem:[#allocation5 + $0x1a0] sm:$0xf]
    %v187 = vld [vmem:[#allocation5 + $0x1a4] sm:$0xf]
    %v188 = vld [vmem:[#allocation5 + $0x1a8] sm:$0xf]
    %v189 = vld [vmem:[#allocation5 + $0x1ac] sm:$0xf]
    %v190 = vld [vmem:[#allocation5 + $0x1b0] sm:$0xf]
    %v191 = vld [vmem:[#allocation5 + $0x1b4] sm:$0xf]
    %v192 = vld [vmem:[#allocation5 + $0x1b8] sm:$0xf]
    %v193 = vld [vmem:[#allocation5 + $0x1bc] sm:$0xf]
    %v194 = vld [vmem:[#allocation5 + $0x1c0] sm:$0xf]
    %v195 = vld [vmem:[#allocation5 + $0x1c4] sm:$0xf]
    %v196 = vld [vmem:[#allocation5 + $0x1c8] sm:$0xf]
    %v197 = vld [vmem:[#allocation5 + $0x1cc] sm:$0xf]
    %v198 = vld [vmem:[#allocation5 + $0x1d0] sm:$0xf]
    %v199 = vld [vmem:[#allocation5 + $0x1d4] sm:$0xf]
    %v200 = vld [vmem:[#allocation5 + $0x1d8] sm:$0xf]
    %v201 = vld [vmem:[#allocation5 + $0x1dc] sm:$0xf]
    %v202 = vld [vmem:[#allocation5 + $0x1e0] sm:$0xf]
    %v203 = vld [vmem:[#allocation5 + $0x1e4] sm:$0xf]
    %v204 = vld [vmem:[#allocation5 + $0x1e8] sm:$0xf]
    %v205 = vld [vmem:[#allocation5 + $0x1ec] sm:$0xf]
    %v206 = vld [vmem:[#allocation5 + $0x1f0] sm:$0xf]
    %v207 = vld [vmem:[#allocation5 + $0x1f4] sm:$0xf]
    %v208 = vld [vmem:[#allocation5 + $0x1f8] sm:$0xf]
    %v209 = vld [vmem:[#allocation5 + $0x1fc] sm:$0xf]
    %v210 = vld [vmem:[%s2] sm:$0x1]
    %v212 = vlaneseq
    %v213 = vshrl.u32 %v212, 7
    %v214 = vsub.s32 0, %v213
    %v215 = vrot.slane %v210, %v214
    %v218 = vcombine.high %v81, %v81
    %v220 = vunpack.c.l.s4 1966171168
    %v221 = vunpack.c.0.s8 %v220
    %v222 = vlaneseq
    %v223 = vshrl.u32 %v222, 7
    %v224 = vsub.s32 %v221, %v223
    %v225 = vrot.slane %v81, %v224
    %v227 = vunpack.c.l.s4 1966171168
    %v228 = vunpack.c.0.s8 %v227
    %v229 = vlaneseq
    %v230 = vshrl.u32 %v229, 7
    %v231 = vsub.s32 %v228, %v230
    %v232 = vrot.slane %v218, %v231
    %v233 = vcombine.high %v225, %v225
    %v234 = vcombine.high %v232, %v232
    %v236 = vunpack.c.l.s4 1966171168
    %v237 = vunpack.c.0.s8 %v236
    %v238 = vlaneseq
    %v239 = vshrl.u32 %v238, 7
    %v240 = vsub.s32 %v237, %v239
    %v241 = vrot.slane %v225, %v240
    %v243 = vunpack.c.l.s4 1966171168
    %v244 = vunpack.c.0.s8 %v243
    %v245 = vlaneseq
    %v246 = vshrl.u32 %v245, 7
    %v247 = vsub.s32 %v244, %v246
    %v248 = vrot.slane %v232, %v247
    %v250 = vunpack.c.l.s4 1966171168
    %v251 = vunpack.c.0.s8 %v250
    %v252 = vlaneseq
    %v253 = vshrl.u32 %v252, 7
    %v254 = vsub.s32 %v251, %v253
    %v255 = vrot.slane %v233, %v254
    %v257 = vunpack.c.l.s4 1966171168
    %v258 = vunpack.c.0.s8 %v257
    %v259 = vlaneseq
    %v260 = vshrl.u32 %v259, 7
    %v261 = vsub.s32 %v258, %v260
    %v262 = vrot.slane %v234, %v261
    %v263 = vcombine.high %v241, %v241
    %v264 = vcombine.high %v248, %v248
    %v265 = vcombine.high %v255, %v255
    %v266 = vcombine.high %v262, %v262
    %v403 = vunpack.c.l.b16 %v82
    %v404 = vunpack.c.l.b16 %v83
    %v405 = vunpack.c.l.b16 %v84
    %v406 = vunpack.c.l.b16 %v85
    %v407 = vunpack.c.l.b16 %v86
    %v408 = vunpack.c.l.b16 %v87
    %v409 = vunpack.c.l.b16 %v88
    %v410 = vunpack.c.l.b16 %v89
    %v411 = vunpack.c.l.b16 %v90
    %v412 = vunpack.c.l.b16 %v91
    %v413 = vunpack.c.l.b16 %v92
    %v414 = vunpack.c.l.b16 %v93
    %v415 = vunpack.c.l.b16 %v94
    %v416 = vunpack.c.l.b16 %v95
    %v417 = vunpack.c.l.b16 %v96
    %v418 = vunpack.c.l.b16 %v97
    %v419 = vunpack.c.l.b16 %v98
    %v420 = vunpack.c.l.b16 %v99
    %v421 = vunpack.c.l.b16 %v100
    %v422 = vunpack.c.l.b16 %v101
    %v423 = vunpack.c.l.b16 %v102
    %v424 = vunpack.c.l.b16 %v103
    %v425 = vunpack.c.l.b16 %v104
    %v426 = vunpack.c.l.b16 %v105
    %v427 = vunpack.c.l.b16 %v106
    %v428 = vunpack.c.l.b16 %v107
    %v429 = vunpack.c.l.b16 %v108
    %v430 = vunpack.c.l.b16 %v109
    %v431 = vunpack.c.l.b16 %v110
    %v432 = vunpack.c.l.b16 %v111
    %v433 = vunpack.c.l.b16 %v112
    %v434 = vunpack.c.l.b16 %v113
    %v435 = vunpack.c.l.b16 %v114
    %v436 = vunpack.c.l.b16 %v115
    %v437 = vunpack.c.l.b16 %v116
    %v438 = vunpack.c.l.b16 %v117
    %v439 = vunpack.c.l.b16 %v118
    %v440 = vunpack.c.l.b16 %v119
    %v441 = vunpack.c.l.b16 %v120
    %v442 = vunpack.c.l.b16 %v121
    %v443 = vunpack.c.l.b16 %v122
    %v444 = vunpack.c.l.b16 %v123
    %v445 = vunpack.c.l.b16 %v124
    %v446 = vunpack.c.l.b16 %v125
    %v447 = vunpack.c.l.b16 %v126
    %v448 = vunpack.c.l.b16 %v127
    %v449 = vunpack.c.l.b16 %v128
    %v450 = vunpack.c.l.b16 %v129
    %v451 = vunpack.c.l.b16 %v130
    %v452 = vunpack.c.l.b16 %v131
    %v453 = vunpack.c.l.b16 %v132
    %v454 = vunpack.c.l.b16 %v133
    %v455 = vunpack.c.l.b16 %v134
    %v456 = vunpack.c.l.b16 %v135
    %v457 = vunpack.c.l.b16 %v136
    %v458 = vunpack.c.l.b16 %v137
    %v459 = vunpack.c.l.b16 %v138
    %v460 = vunpack.c.l.b16 %v139
    %v461 = vunpack.c.l.b16 %v140
    %v462 = vunpack.c.l.b16 %v141
    %v463 = vunpack.c.l.b16 %v142
    %v464 = vunpack.c.l.b16 %v143
    %v465 = vunpack.c.l.b16 %v144
    %v466 = vunpack.c.l.b16 %v145
    %v467 = vunpack.c.l.b16 %v146
    %v468 = vunpack.c.l.b16 %v147
    %v469 = vunpack.c.l.b16 %v148
    %v470 = vunpack.c.l.b16 %v149
    %v471 = vunpack.c.l.b16 %v150
    %v472 = vunpack.c.l.b16 %v151
    %v473 = vunpack.c.l.b16 %v152
    %v474 = vunpack.c.l.b16 %v153
    %v475 = vunpack.c.l.b16 %v154
    %v476 = vunpack.c.l.b16 %v155
    %v477 = vunpack.c.l.b16 %v156
    %v478 = vunpack.c.l.b16 %v157
    %v479 = vunpack.c.l.b16 %v158
    %v480 = vunpack.c.l.b16 %v159
    %v481 = vunpack.c.l.b16 %v160
    %v482 = vunpack.c.l.b16 %v161
    %v483 = vunpack.c.l.b16 %v162
    %v484 = vunpack.c.l.b16 %v163
    %v485 = vunpack.c.l.b16 %v164
    %v486 = vunpack.c.l.b16 %v165
    %v487 = vunpack.c.l.b16 %v166
    %v488 = vunpack.c.l.b16 %v167
    %v489 = vunpack.c.l.b16 %v168
    %v490 = vunpack.c.l.b16 %v169
    %v491 = vunpack.c.l.b16 %v170
    %v492 = vunpack.c.l.b16 %v171
    %v493 = vunpack.c.l.b16 %v172
    %v494 = vunpack.c.l.b16 %v173
    %v495 = vunpack.c.l.b16 %v174
    %v496 = vunpack.c.l.b16 %v175
    %v497 = vunpack.c.l.b16 %v176
    %v498 = vunpack.c.l.b16 %v177
    %v499 = vunpack.c.l.b16 %v178
    %v500 = vunpack.c.l.b16 %v179
    %v501 = vunpack.c.l.b16 %v180
    %v502 = vunpack.c.l.b16 %v181
    %v503 = vunpack.c.l.b16 %v182
    %v504 = vunpack.c.l.b16 %v183
    %v505 = vunpack.c.l.b16 %v184
    %v506 = vunpack.c.l.b16 %v185
    %v507 = vunpack.c.l.b16 %v186
    %v508 = vunpack.c.l.b16 %v187
    %v509 = vunpack.c.l.b16 %v188
    %v510 = vunpack.c.l.b16 %v189
    %v511 = vunpack.c.l.b16 %v190
    %v512 = vunpack.c.l.b16 %v191
    %v513 = vunpack.c.l.b16 %v192
    %v514 = vunpack.c.l.b16 %v193
    %v515 = vunpack.c.l.b16 %v194
    %v516 = vunpack.c.l.b16 %v195
    %v517 = vunpack.c.l.b16 %v196
    %v518 = vunpack.c.l.b16 %v197
    %v519 = vunpack.c.l.b16 %v198
    %v520 = vunpack.c.l.b16 %v199
    %v521 = vunpack.c.l.b16 %v200
    %v522 = vunpack.c.l.b16 %v201
    %v523 = vunpack.c.l.b16 %v202
    %v524 = vunpack.c.l.b16 %v203
    %v525 = vunpack.c.l.b16 %v204
    %v526 = vunpack.c.l.b16 %v205
    %v527 = vunpack.c.l.b16 %v206
    %v528 = vunpack.c.l.b16 %v207
    %v529 = vunpack.c.l.b16 %v208
    %v530 = vunpack.c.l.b16 %v209
    %v531 = vpack.c.b16 %v404, %v403
    %v532 = vpack.c.b16 %v406, %v405
    %v533 = vpack.c.b16 %v408, %v407
    %v534 = vpack.c.b16 %v410, %v409
    %v535 = vpack.c.b16 %v412, %v411
    %v536 = vpack.c.b16 %v414, %v413
    %v537 = vpack.c.b16 %v416, %v415
    %v538 = vpack.c.b16 %v418, %v417
    %v539 = vpack.c.b16 %v420, %v419
    %v540 = vpack.c.b16 %v422, %v421
    %v541 = vpack.c.b16 %v424, %v423
    %v542 = vpack.c.b16 %v426, %v425
    %v543 = vpack.c.b16 %v428, %v427
    %v544 = vpack.c.b16 %v430, %v429
    %v545 = vpack.c.b16 %v432, %v431
    %v546 = vpack.c.b16 %v434, %v433
    %v547 = vpack.c.b16 %v436, %v435
    %v548 = vpack.c.b16 %v438, %v437
    %v549 = vpack.c.b16 %v440, %v439
    %v550 = vpack.c.b16 %v442, %v441
    %v551 = vpack.c.b16 %v444, %v443
    %v552 = vpack.c.b16 %v446, %v445
    %v553 = vpack.c.b16 %v448, %v447
    %v554 = vpack.c.b16 %v450, %v449
    %v555 = vpack.c.b16 %v452, %v451
    %v556 = vpack.c.b16 %v454, %v453
    %v557 = vpack.c.b16 %v456, %v455
    %v558 = vpack.c.b16 %v458, %v457
    %v559 = vpack.c.b16 %v460, %v459
    %v560 = vpack.c.b16 %v462, %v461
    %v561 = vpack.c.b16 %v464, %v463
    %v562 = vpack.c.b16 %v466, %v465
    %v563 = vpack.c.b16 %v468, %v467
    %v564 = vpack.c.b16 %v470, %v469
    %v565 = vpack.c.b16 %v472, %v471
    %v566 = vpack.c.b16 %v474, %v473
    %v567 = vpack.c.b16 %v476, %v475
    %v568 = vpack.c.b16 %v478, %v477
    %v569 = vpack.c.b16 %v480, %v479
    %v570 = vpack.c.b16 %v482, %v481
    %v571 = vpack.c.b16 %v484, %v483
    %v572 = vpack.c.b16 %v486, %v485
    %v573 = vpack.c.b16 %v488, %v487
    %v574 = vpack.c.b16 %v490, %v489
    %v575 = vpack.c.b16 %v492, %v491
    %v576 = vpack.c.b16 %v494, %v493
    %v577 = vpack.c.b16 %v496, %v495
    %v578 = vpack.c.b16 %v498, %v497
    %v579 = vpack.c.b16 %v500, %v499
    %v580 = vpack.c.b16 %v502, %v501
    %v581 = vpack.c.b16 %v504, %v503
    %v582 = vpack.c.b16 %v506, %v505
    %v583 = vpack.c.b16 %v508, %v507
    %v584 = vpack.c.b16 %v510, %v509
    %v585 = vpack.c.b16 %v512, %v511
    %v586 = vpack.c.b16 %v514, %v513
    %v587 = vpack.c.b16 %v516, %v515
    %v588 = vpack.c.b16 %v518, %v517
    %v589 = vpack.c.b16 %v520, %v519
    %v590 = vpack.c.b16 %v522, %v521
    %v591 = vpack.c.b16 %v524, %v523
    %v592 = vpack.c.b16 %v526, %v525
    %v593 = vpack.c.b16 %v528, %v527
    %v594 = vpack.c.b16 %v530, %v529
    %659 = vmatprep.subr.bf16.mxu0 0
    %660 = vmatpush1.bf16.msra.mxu0 %v531
    %661 = vmatprep.subr.bf16.mxu0 0
    %662 = vmatpush1.bf16.msra.mxu0 %v532
    %663 = vmatprep.subr.bf16.mxu0 0
    %664 = vmatpush1.bf16.msra.mxu0 %v533
    %665 = vmatprep.subr.bf16.mxu0 0
    %666 = vmatpush1.bf16.msra.mxu0 %v534
    %667 = vmatprep.subr.bf16.mxu0 0
    %668 = vmatpush1.bf16.msra.mxu0 %v535
    %669 = vmatprep.subr.bf16.mxu0 0
    %670 = vmatpush1.bf16.msra.mxu0 %v536
    %671 = vmatprep.subr.bf16.mxu0 0
    %672 = vmatpush1.bf16.msra.mxu0 %v537
    %673 = vmatprep.subr.bf16.mxu0 0
    %674 = vmatpush1.bf16.msra.mxu0 %v538
    %675 = vmatprep.subr.bf16.mxu0 0
    %676 = vmatpush1.bf16.msra.mxu0 %v539
    %677 = vmatprep.subr.bf16.mxu0 0
    %678 = vmatpush1.bf16.msra.mxu0 %v540
    %679 = vmatprep.subr.bf16.mxu0 0
    %680 = vmatpush1.bf16.msra.mxu0 %v541
    %681 = vmatprep.subr.bf16.mxu0 0
    %682 = vmatpush1.bf16.msra.mxu0 %v542
    %683 = vmatprep.subr.bf16.mxu0 0
    %684 = vmatpush1.bf16.msra.mxu0 %v543
    %685 = vmatprep.subr.bf16.mxu0 0
    %686 = vmatpush1.bf16.msra.mxu0 %v544
    %687 = vmatprep.subr.bf16.mxu0 0
    %688 = vmatpush1.bf16.msra.mxu0 %v545
    %689 = vmatprep.subr.bf16.mxu0 0
    %690 = vmatpush1.bf16.msra.mxu0 %v546
    %691 = vmatprep.mubr.bf16.mxu0 %v255
    %692 = vmatmul.mubr.bf16.gmra.mrb[0].mxu0 %v241
    %v693 = vpop.f32.mrb[0].mxu0
    %v694 = vadd.f32 %v215, %v693
    %v695 = vpop.f32.mrb[0].mxu0
    %v696 = vpop.f32.mrb[0].mxu0
    %v697 = vpop.f32.mrb[0].mxu0
    %698 = vdwg.mxu0
    %699 = vmatprep.subr.bf16.mxu0 0
    %700 = vmatpush1.bf16.msra.mxu0 %v547
    %701 = vmatprep.subr.bf16.mxu0 0
    %702 = vmatpush1.bf16.msra.mxu0 %v548
    %703 = vmatprep.subr.bf16.mxu0 0
    %704 = vmatpush1.bf16.msra.mxu0 %v549
    %705 = vmatprep.subr.bf16.mxu0 0
    %706 = vmatpush1.bf16.msra.mxu0 %v550
    %707 = vmatprep.subr.bf16.mxu0 0
    %708 = vmatpush1.bf16.msra.mxu0 %v551
    %709 = vmatprep.subr.bf16.mxu0 0
    %710 = vmatpush1.bf16.msra.mxu0 %v552
    %711 = vmatprep.subr.bf16.mxu0 0
    %712 = vmatpush1.bf16.msra.mxu0 %v553
    %713 = vmatprep.subr.bf16.mxu0 0
    %714 = vmatpush1.bf16.msra.mxu0 %v554
    %715 = vmatprep.subr.bf16.mxu0 0
    %716 = vmatpush1.bf16.msra.mxu0 %v555
    %717 = vmatprep.subr.bf16.mxu0 0
    %718 = vmatpush1.bf16.msra.mxu0 %v556
    %719 = vmatprep.subr.bf16.mxu0 0
    %720 = vmatpush1.bf16.msra.mxu0 %v557
    %721 = vmatprep.subr.bf16.mxu0 0
    %722 = vmatpush1.bf16.msra.mxu0 %v558
    %723 = vmatprep.subr.bf16.mxu0 0
    %724 = vmatpush1.bf16.msra.mxu0 %v559
    %725 = vmatprep.subr.bf16.mxu0 0
    %726 = vmatpush1.bf16.msra.mxu0 %v560
    %727 = vmatprep.subr.bf16.mxu0 0
    %728 = vmatpush1.bf16.msra.mxu0 %v561
    %729 = vmatprep.subr.bf16.mxu0 0
    %730 = vmatpush1.bf16.msra.mxu0 %v562
    %731 = vmatprep.mubr.bf16.mxu0 %v265
    %732 = vmatmul.mubr.bf16.gmra.mrb[0].mxu0 %v263
    %v733 = vpop.f32.mrb[0].mxu0
    %v734 = vadd.f32 %v694, %v733
    %v735 = vpop.f32.mrb[0].mxu0
    %v736 = vpop.f32.mrb[0].mxu0
    %v737 = vpop.f32.mrb[0].mxu0
    %738 = vdwg.mxu0
    %739 = vmatprep.subr.bf16.mxu0 0
    %740 = vmatpush1.bf16.msra.mxu0 %v563
    %741 = vmatprep.subr.bf16.mxu0 0
    %742 = vmatpush1.bf16.msra.mxu0 %v564
    %743 = vmatprep.subr.bf16.mxu0 0
    %744 = vmatpush1.bf16.msra.mxu0 %v565
    %745 = vmatprep.subr.bf16.mxu0 0
    %746 = vmatpush1.bf16.msra.mxu0 %v566
    %747 = vmatprep.subr.bf16.mxu0 0
    %748 = vmatpush1.bf16.msra.mxu0 %v567
    %749 = vmatprep.subr.bf16.mxu0 0
    %750 = vmatpush1.bf16.msra.mxu0 %v568
    %751 = vmatprep.subr.bf16.mxu0 0
    %752 = vmatpush1.bf16.msra.mxu0 %v569
    %753 = vmatprep.subr.bf16.mxu0 0
    %754 = vmatpush1.bf16.msra.mxu0 %v570
    %755 = vmatprep.subr.bf16.mxu0 0
    %756 = vmatpush1.bf16.msra.mxu0 %v571
    %757 = vmatprep.subr.bf16.mxu0 0
    %758 = vmatpush1.bf16.msra.mxu0 %v572
    %759 = vmatprep.subr.bf16.mxu0 0
    %760 = vmatpush1.bf16.msra.mxu0 %v573
    %761 = vmatprep.subr.bf16.mxu0 0
    %762 = vmatpush1.bf16.msra.mxu0 %v574
    %763 = vmatprep.subr.bf16.mxu0 0
    %764 = vmatpush1.bf16.msra.mxu0 %v575
    %765 = vmatprep.subr.bf16.mxu0 0
    %766 = vmatpush1.bf16.msra.mxu0 %v576
    %767 = vmatprep.subr.bf16.mxu0 0
    %768 = vmatpush1.bf16.msra.mxu0 %v577
    %769 = vmatprep.subr.bf16.mxu0 0
    %770 = vmatpush1.bf16.msra.mxu0 %v578
    %771 = vmatprep.mubr.bf16.mxu0 %v262
    %772 = vmatmul.mubr.bf16.gmra.mrb[0].mxu0 %v248
    %v773 = vpop.f32.mrb[0].mxu0
    %v774 = vadd.f32 %v734, %v773
    %v775 = vpop.f32.mrb[0].mxu0
    %v776 = vpop.f32.mrb[0].mxu0
    %v777 = vpop.f32.mrb[0].mxu0
    %778 = vdwg.mxu0
    %779 = vmatprep.subr.bf16.mxu0 0
    %780 = vmatpush1.bf16.msra.mxu0 %v579
    %781 = vmatprep.subr.bf16.mxu0 0
    %782 = vmatpush1.bf16.msra.mxu0 %v580
    %783 = vmatprep.subr.bf16.mxu0 0
    %784 = vmatpush1.bf16.msra.mxu0 %v581
    %785 = vmatprep.subr.bf16.mxu0 0
    %786 = vmatpush1.bf16.msra.mxu0 %v582
    %787 = vmatprep.subr.bf16.mxu0 0
    %788 = vmatpush1.bf16.msra.mxu0 %v583
    %789 = vmatprep.subr.bf16.mxu0 0
    %790 = vmatpush1.bf16.msra.mxu0 %v584
    %791 = vmatprep.subr.bf16.mxu0 0
    %792 = vmatpush1.bf16.msra.mxu0 %v585
    %793 = vmatprep.subr.bf16.mxu0 0
    %794 = vmatpush1.bf16.msra.mxu0 %v586
    %795 = vmatprep.subr.bf16.mxu0 0
    %796 = vmatpush1.bf16.msra.mxu0 %v587
    %797 = vmatprep.subr.bf16.mxu0 0
    %798 = vmatpush1.bf16.msra.mxu0 %v588
    %799 = vmatprep.subr.bf16.mxu0 0
    %800 = vmatpush1.bf16.msra.mxu0 %v589
    %801 = vmatprep.subr.bf16.mxu0 0
    %802 = vmatpush1.bf16.msra.mxu0 %v590
    %803 = vmatprep.subr.bf16.mxu0 0
    %804 = vmatpush1.bf16.msra.mxu0 %v591
    %805 = vmatprep.subr.bf16.mxu0 0
    %806 = vmatpush1.bf16.msra.mxu0 %v592
    %807 = vmatprep.subr.bf16.mxu0 0
    %808 = vmatpush1.bf16.msra.mxu0 %v593
    %809 = vmatprep.subr.bf16.mxu0 0
    %810 = vmatpush1.bf16.msra.mxu0 %v594
    %811 = vmatprep.mubr.bf16.mxu0 %v266
    %812 = vmatmul.mubr.bf16.gmra.mrb[0].mxu0 %v264
    %v813 = vpop.f32.mrb[0].mxu0
    %v814 = vadd.f32 %v774, %v813
    %v815 = vpop.f32.mrb[0].mxu0
    %v816 = vpop.f32.mrb[0].mxu0
    %v817 = vpop.f32.mrb[0].mxu0
    %818 = vdwg.mxu0
    %v819 = vmax.f32 %v814, 0.0
    %v820 = vpack.c.bf16 %v819, %v819
    %v821 = vld [vmem:[#allocation7] sm:$0xff]
    %v822 = vld [vmem:[#allocation7 + $0x8] sm:$0xff]
    %v823 = vld [vmem:[#allocation7 + $0x10] sm:$0xff]
    %v824 = vld [vmem:[#allocation7 + $0x18] sm:$0xff]
    %v825 = vld [vmem:[#allocation7 + $0x20] sm:$0xff]
    %v826 = vld [vmem:[#allocation7 + $0x28] sm:$0xff]
    %v827 = vld [vmem:[#allocation7 + $0x30] sm:$0xff]
    %v828 = vld [vmem:[#allocation7 + $0x38] sm:$0xff]
    %v829 = vld [vmem:[#allocation7 + $0x40] sm:$0xff]
    %v830 = vld [vmem:[#allocation7 + $0x48] sm:$0xff]
    %v831 = vld [vmem:[#allocation7 + $0x50] sm:$0xff]
    %v832 = vld [vmem:[#allocation7 + $0x58] sm:$0xff]
    %v833 = vld [vmem:[#allocation7 + $0x60] sm:$0xff]
    %v834 = vld [vmem:[#allocation7 + $0x68] sm:$0xff]
    %v835 = vld [vmem:[#allocation7 + $0x70] sm:$0xff]
    %v836 = vld [vmem:[#allocation7 + $0x78] sm:$0xff]
    %v837 = vld [vmem:[%s4] sm:$0x3]
    %v839 = vlaneseq
    %v840 = vshrl.u32 %v839, 7
    %v841 = vsub.s32 0, %v840
    %v842 = vrot.slane %v837, %v841
    %v843 = vlaneseq
    %v844 = vshrl.u32 %v843, 7
    %v845 = vsub.s32 1, %v844
    %v846 = vrot.slane %v837, %v845
    %v865 = vunpack.c.l.b16 %v821
    %v866 = vunpack.c.h.b16 %v821
    %v867 = vunpack.c.l.b16 %v822
    %v868 = vunpack.c.h.b16 %v822
    %v869 = vunpack.c.l.b16 %v823
    %v870 = vunpack.c.h.b16 %v823
    %v871 = vunpack.c.l.b16 %v824
    %v872 = vunpack.c.h.b16 %v824
    %v873 = vunpack.c.l.b16 %v825
    %v874 = vunpack.c.h.b16 %v825
    %v875 = vunpack.c.l.b16 %v826
    %v876 = vunpack.c.h.b16 %v826
    %v877 = vunpack.c.l.b16 %v827
    %v878 = vunpack.c.h.b16 %v827
    %v879 = vunpack.c.l.b16 %v828
    %v880 = vunpack.c.h.b16 %v828
    %v881 = vunpack.c.l.b16 %v829
    %v882 = vunpack.c.h.b16 %v829
    %v883 = vunpack.c.l.b16 %v830
    %v884 = vunpack.c.h.b16 %v830
    %v885 = vunpack.c.l.b16 %v831
    %v886 = vunpack.c.h.b16 %v831
    %v887 = vunpack.c.l.b16 %v832
    %v888 = vunpack.c.h.b16 %v832
    %v889 = vunpack.c.l.b16 %v833
    %v890 = vunpack.c.h.b16 %v833
    %v891 = vunpack.c.l.b16 %v834
    %v892 = vunpack.c.h.b16 %v834
    %v893 = vunpack.c.l.b16 %v835
    %v894 = vunpack.c.h.b16 %v835
    %v895 = vunpack.c.l.b16 %v836
    %v896 = vunpack.c.h.b16 %v836
    %v897 = vpack.c.b16 %v867, %v865
    %v898 = vpack.c.b16 %v868, %v866
    %v899 = vpack.c.b16 %v871, %v869
    %v900 = vpack.c.b16 %v872, %v870
    %v901 = vpack.c.b16 %v875, %v873
    %v902 = vpack.c.b16 %v876, %v874
    %v903 = vpack.c.b16 %v879, %v877
    %v904 = vpack.c.b16 %v880, %v878
    %v905 = vpack.c.b16 %v883, %v881
    %v906 = vpack.c.b16 %v884, %v882
    %v907 = vpack.c.b16 %v887, %v885
    %v908 = vpack.c.b16 %v888, %v886
    %v909 = vpack.c.b16 %v891, %v889
    %v910 = vpack.c.b16 %v892, %v890
    %v911 = vpack.c.b16 %v895, %v893
    %v912 = vpack.c.b16 %v896, %v894
    %929 = vmatprep.subr.bf16.mxu0 %v898
    %930 = vmatpush1.bf16.msra.mxu0 %v897
    %931 = vmatprep.subr.bf16.mxu0 %v900
    %932 = vmatpush1.bf16.msra.mxu0 %v899
    %933 = vmatprep.subr.bf16.mxu0 %v902
    %934 = vmatpush1.bf16.msra.mxu0 %v901
    %935 = vmatprep.subr.bf16.mxu0 %v904
    %936 = vmatpush1.bf16.msra.mxu0 %v903
    %937 = vmatprep.subr.bf16.mxu0 %v906
    %938 = vmatpush1.bf16.msra.mxu0 %v905
    %939 = vmatprep.subr.bf16.mxu0 %v908
    %940 = vmatpush1.bf16.msra.mxu0 %v907
    %941 = vmatprep.subr.bf16.mxu0 %v910
    %942 = vmatpush1.bf16.msra.mxu0 %v909
    %943 = vmatprep.subr.bf16.mxu0 %v912
    %944 = vmatpush1.bf16.msra.mxu0 %v911
    %945 = vmatprep.subr.bf16.mxu0 0
    %946 = vmatpush1.bf16.msra.mxu0 0
    %947 = vmatprep.subr.bf16.mxu0 0
    %948 = vmatpush1.bf16.msra.mxu0 0
    %949 = vmatprep.subr.bf16.mxu0 0
    %950 = vmatpush1.bf16.msra.mxu0 0
    %951 = vmatprep.subr.bf16.mxu0 0
    %952 = vmatpush1.bf16.msra.mxu0 0
    %953 = vmatprep.subr.bf16.mxu0 0
    %954 = vmatpush1.bf16.msra.mxu0 0
    %955 = vmatprep.subr.bf16.mxu0 0
    %956 = vmatpush1.bf16.msra.mxu0 0
    %957 = vmatprep.subr.bf16.mxu0 0
    %958 = vmatpush1.bf16.msra.mxu0 0
    %959 = vmatprep.subr.bf16.mxu0 0
    %960 = vmatpush1.bf16.msra.mxu0 0
    %961 = vmatprep.mubr.bf16.mxu0 0
    %962 = vmatmul.mubr.bf16.gmra.mrb[0].mxu0 %v820
    %v963 = vpop.f32.mrb[0].mxu0
    %v964 = vadd.f32 %v842, %v963
    %v965 = vpop.f32.mrb[0].mxu0
    %v966 = vadd.f32 %v846, %v965
    %v967 = vpop.f32.mrb[0].mxu0
    %v968 = vpop.f32.mrb[0].mxu0
    %969 = vdwg.mxu0
    %v970 = vmax.f32 %v964, 0.0
    %v971 = vmax.f32 %v966, 0.0
    %v972 = vpack.c.bf16 %v970, %v970
    %v973 = vpack.c.bf16 %v971, %v971
    %v974 = vld [vmem:[#allocation8] sm:$0xf]
    %v975 = vld [vmem:[#allocation8 + $0x4] sm:$0xf]
    %v976 = vld [vmem:[#allocation8 + $0x8] sm:$0xf]
    %v977 = vld [vmem:[#allocation8 + $0xc] sm:$0xf]
    %v978 = vld [vmem:[#allocation8 + $0x10] sm:$0xf]
    %v979 = vld [vmem:[#allocation8 + $0x14] sm:$0xf]
    %v980 = vld [vmem:[#allocation8 + $0x18] sm:$0xf]
    %v981 = vld [vmem:[#allocation8 + $0x1c] sm:$0xf]
    %v982 = vld [vmem:[#allocation8 + $0x20] sm:$0xf]
    %v983 = vld [vmem:[#allocation8 + $0x24] sm:$0xf]
    %v984 = vld [vmem:[#allocation8 + $0x28] sm:$0xf]
    %v985 = vld [vmem:[#allocation8 + $0x2c] sm:$0xf]
    %v986 = vld [vmem:[#allocation8 + $0x30] sm:$0xf]
    %v987 = vld [vmem:[#allocation8 + $0x34] sm:$0xf]
    %v988 = vld [vmem:[#allocation8 + $0x38] sm:$0xf]
    %v989 = vld [vmem:[#allocation8 + $0x3c] sm:$0xf]
    %v990 = vld [vmem:[#allocation8 + $0x40] sm:$0xf]
    %v991 = vld [vmem:[#allocation8 + $0x44] sm:$0xf]
    %v992 = vld [vmem:[#allocation8 + $0x48] sm:$0xf]
    %v993 = vld [vmem:[#allocation8 + $0x4c] sm:$0xf]
    %v994 = vld [vmem:[#allocation8 + $0x50] sm:$0xf]
    %v995 = vld [vmem:[#allocation8 + $0x54] sm:$0xf]
    %v996 = vld [vmem:[#allocation8 + $0x58] sm:$0xf]
    %v997 = vld [vmem:[#allocation8 + $0x5c] sm:$0xf]
    %v998 = vld [vmem:[#allocation8 + $0x60] sm:$0xf]
    %v999 = vld [vmem:[#allocation8 + $0x64] sm:$0xf]
    %v1000 = vld [vmem:[#allocation8 + $0x68] sm:$0xf]
    %v1001 = vld [vmem:[#allocation8 + $0x6c] sm:$0xf]
    %v1002 = vld [vmem:[#allocation8 + $0x70] sm:$0xf]
    %v1003 = vld [vmem:[#allocation8 + $0x74] sm:$0xf]
    %v1004 = vld [vmem:[#allocation8 + $0x78] sm:$0xf]
    %v1005 = vld [vmem:[#allocation8 + $0x7c] sm:$0xf]
    %v1006 = vld [vmem:[%s6] sm:$0x1]
    %v1008 = vlaneseq
    %v1009 = vshrl.u32 %v1008, 7
    %v1010 = vsub.s32 0, %v1009
    %v1011 = vrot.slane %v1006, %v1010
    %v1045 = vunpack.c.l.b16 %v974
    %v1046 = vunpack.c.l.b16 %v975
    %v1047 = vunpack.c.l.b16 %v976
    %v1048 = vunpack.c.l.b16 %v977
    %v1049 = vunpack.c.l.b16 %v978
    %v1050 = vunpack.c.l.b16 %v979
    %v1051 = vunpack.c.l.b16 %v980
    %v1052 = vunpack.c.l.b16 %v981
    %v1053 = vunpack.c.l.b16 %v982
    %v1054 = vunpack.c.l.b16 %v983
    %v1055 = vunpack.c.l.b16 %v984
    %v1056 = vunpack.c.l.b16 %v985
    %v1057 = vunpack.c.l.b16 %v986
    %v1058 = vunpack.c.l.b16 %v987
    %v1059 = vunpack.c.l.b16 %v988
    %v1060 = vunpack.c.l.b16 %v989
    %v1061 = vunpack.c.l.b16 %v990
    %v1062 = vunpack.c.l.b16 %v991
    %v1063 = vunpack.c.l.b16 %v992
    %v1064 = vunpack.c.l.b16 %v993
    %v1065 = vunpack.c.l.b16 %v994
    %v1066 = vunpack.c.l.b16 %v995
    %v1067 = vunpack.c.l.b16 %v996
    %v1068 = vunpack.c.l.b16 %v997
    %v1069 = vunpack.c.l.b16 %v998
    %v1070 = vunpack.c.l.b16 %v999
    %v1071 = vunpack.c.l.b16 %v1000
    %v1072 = vunpack.c.l.b16 %v1001
    %v1073 = vunpack.c.l.b16 %v1002
    %v1074 = vunpack.c.l.b16 %v1003
    %v1075 = vunpack.c.l.b16 %v1004
    %v1076 = vunpack.c.l.b16 %v1005
    %v1077 = vpack.c.b16 %v1046, %v1045
    %v1078 = vpack.c.b16 %v1048, %v1047
    %v1079 = vpack.c.b16 %v1050, %v1049
    %v1080 = vpack.c.b16 %v1052, %v1051
    %v1081 = vpack.c.b16 %v1054, %v1053
    %v1082 = vpack.c.b16 %v1056, %v1055
    %v1083 = vpack.c.b16 %v1058, %v1057
    %v1084 = vpack.c.b16 %v1060, %v1059
    %v1085 = vpack.c.b16 %v1062, %v1061
    %v1086 = vpack.c.b16 %v1064, %v1063
    %v1087 = vpack.c.b16 %v1066, %v1065
    %v1088 = vpack.c.b16 %v1068, %v1067
    %v1089 = vpack.c.b16 %v1070, %v1069
    %v1090 = vpack.c.b16 %v1072, %v1071
    %v1091 = vpack.c.b16 %v1074, %v1073
    %v1092 = vpack.c.b16 %v1076, %v1075
    %1109 = vmatprep.subr.bf16.mxu0 0
    %1110 = vmatpush1.bf16.msra.mxu0 %v1077
    %1111 = vmatprep.subr.bf16.mxu0 0
    %1112 = vmatpush1.bf16.msra.mxu0 %v1078
    %1113 = vmatprep.subr.bf16.mxu0 0
    %1114 = vmatpush1.bf16.msra.mxu0 %v1079
    %1115 = vmatprep.subr.bf16.mxu0 0
    %1116 = vmatpush1.bf16.msra.mxu0 %v1080
    %1117 = vmatprep.subr.bf16.mxu0 0
    %1118 = vmatpush1.bf16.msra.mxu0 %v1081
    %1119 = vmatprep.subr.bf16.mxu0 0
    %1120 = vmatpush1.bf16.msra.mxu0 %v1082
    %1121 = vmatprep.subr.bf16.mxu0 0
    %1122 = vmatpush1.bf16.msra.mxu0 %v1083
    %1123 = vmatprep.subr.bf16.mxu0 0
    %1124 = vmatpush1.bf16.msra.mxu0 %v1084
    %1125 = vmatprep.subr.bf16.mxu0 0
    %1126 = vmatpush1.bf16.msra.mxu0 %v1085
    %1127 = vmatprep.subr.bf16.mxu0 0
    %1128 = vmatpush1.bf16.msra.mxu0 %v1086
    %1129 = vmatprep.subr.bf16.mxu0 0
    %1130 = vmatpush1.bf16.msra.mxu0 %v1087
    %1131 = vmatprep.subr.bf16.mxu0 0
    %1132 = vmatpush1.bf16.msra.mxu0 %v1088
    %1133 = vmatprep.subr.bf16.mxu0 0
    %1134 = vmatpush1.bf16.msra.mxu0 %v1089
    %1135 = vmatprep.subr.bf16.mxu0 0
    %1136 = vmatpush1.bf16.msra.mxu0 %v1090
    %1137 = vmatprep.subr.bf16.mxu0 0
    %1138 = vmatpush1.bf16.msra.mxu0 %v1091
    %1139 = vmatprep.subr.bf16.mxu0 0
    %1140 = vmatpush1.bf16.msra.mxu0 %v1092
    %1141 = vmatprep.mubr.bf16.mxu0 %v973
    %1142 = vmatmul.mubr.bf16.gmra.mrb[0].mxu0 %v972
    %v1143 = vpop.f32.mrb[0].mxu0
    %v1144 = vadd.f32 %v1011, %v1143
    %v1145 = vpop.f32.mrb[0].mxu0
    %v1146 = vpop.f32.mrb[0].mxu0
    %v1147 = vpop.f32.mrb[0].mxu0
    %1148 = vdwg.mxu0
    %1149 = vst [vmem:[#allocation10] sm:$0x3] %v1144
    // Predicated region
    $region46: #{tpu_custom_call.1} parent=1 // pred_check
      _
    $region47: #{tpu_custom_call.1} parent=1 // pred_check_branch
      %1151 = sbr.rel (0) target = $region49
    $region48: #{tpu_custom_call.1} parent=1 // pred_region
      %s1153 = ssub.s32 32, 32
      %1154 = vsyncadd [#allocation4], %s1153
      %s1156 = sshll.u32 [#allocation10], 4
      %s1157 = int_to_ptr.vmem [resolvable:$true] %s1156
      %1159 = dma.vmem_to_hbm [thread:$0]  %s1157, 32, %s7, [#allocation4]
    $region49: #{tpu_custom_call.1} parent=1 // pred_fallthru
      _
    // Predicated region
    $region50: #{tpu_custom_call.1} parent=1 // pred_check
      _
    $region51: #{tpu_custom_call.1} parent=1 // pred_check_branch
      %1161 = sbr.rel (0) target = $region53
    $region52: #{tpu_custom_call.1} parent=1 // pred_region
      %1162 = dma.done [#allocation4], 32
    $region53: #{tpu_custom_call.1} parent=1 // pred_fallthru
      _
    %1163 = vsyncpa [#allocation3], 1
    %1164 = vsyncpa [#allocation6], 1
    %1165 = vsyncpa [#allocation9], 1
    %1166 = vsyncpa [#allocation4], 1

</llo_original>
